<compile_context>
chip_gen: v7x
topology: tpu7x:2x2x1
jax: 0.10.0
libtpu: 0.0.40
codegen_flags: <defaults>
</compile_context>

<pallas_src>
import jax
import jax.numpy as jnp
from jax.experimental import pallas as pl
from jax.experimental.pallas import tpu as pltpu


def _lovasz_chunk_kernel(err_ref, tgt_ref, tsum_ref, tri_ref, low_ref,
                         out_ref, carry_ref):
    # err_ref  : (1, R, T) f32   sorted hinge errors (descending), chunk c of batch b
    # tgt_ref  : (1, R, T) bf16  target gathered with the same permutation
    # tsum_ref : (1, 1, 1) f32   total number of positives in batch row b
    # tri_ref  : (T, T)    bf16  tri[j, i] = (j <= i)  -> inclusive cumsum matmul
    # low_ref  : (R, R)    f32   low[r, s] = (s < r)   -> exclusive row carry
    # out_ref  : (1, 1, 1) f32   per-batch partial sum (accumulated over chunks)
    # carry_ref: (1, 1)    f32   running target cumsum from previous chunks
    c = pl.program_id(1)

    @pl.when(c == 0)
    def _init():
        out_ref[...] = jnp.zeros_like(out_ref)
        carry_ref[...] = jnp.zeros_like(carry_ref)

    err = err_ref[0]                          # (R, T) f32
    tgt_bf = tgt_ref[0]                       # (R, T) bf16
    tgt = tgt_bf.astype(jnp.float32)          # exact: values are 0/1
    t_sum = tsum_ref[0]                       # (1, 1) f32
    R, T = err.shape

    # Within-tile inclusive cumsum on the MXU: within[r, i] = sum_{j<=i} tgt[r, j]
    within = jnp.dot(tgt_bf, tri_ref[...],
                     preferred_element_type=jnp.float32)              # (R, T)

    chunk_carry = carry_ref[...]                                      # (1, 1)
    if R > 1:
        # Exclusive prefix over the tile-row totals (carry across rows of this chunk).
        row_total = within[:, T - 1:T]                                # (R, 1)
        carry_rows = jnp.dot(low_ref[...],
                             jnp.broadcast_to(row_total, (R, T)),
                             preferred_element_type=jnp.float32)      # (R, T)
        csum = within + carry_rows + chunk_carry
    else:
        csum = within + chunk_carry

    # Global (0-based) position of every element within the sorted batch row.
    row_i = jax.lax.broadcasted_iota(jnp.int32, (R, T), 0)
    col_i = jax.lax.broadcasted_iota(jnp.int32, (R, T), 1)
    pos_i = c * (R * T) + row_i * T + col_i
    pos_f = pos_i.astype(jnp.float32)

    # Lovasz gradient at position i, and (analytically) at position i-1.
    union = t_sum + (pos_f + 1.0) - csum                  # >= 1 everywhere
    grad = 1.0 - (t_sum - csum) / union

    csum_prev = csum - tgt                                # cumsum at i-1
    union_prev = t_sum + pos_f - csum_prev                # >= 1 for pos >= 1
    union_prev = jnp.where(pos_i == 0, jnp.float32(1.0), union_prev)
    grad_prev = 1.0 - (t_sum - csum_prev) / union_prev

    grad_diff = jnp.where(pos_i == 0, grad, grad - grad_prev)

    per_elem = jnp.maximum(err, 0.0) * grad_diff
    partial = jnp.sum(per_elem, axis=(0, 1), keepdims=True)           # (1, 1)
    out_ref[0] += partial

    # New carry = inclusive cumsum at the last element of this chunk.
    carry_ref[...] = csum[R - 1:R, T - 1:T]


def _mxu_tile() -> int:
    """Native MXU tile width: 128 on TPU v2-v5, 256 on v6e / v7x."""
    try:
        kind = jax.devices()[0].device_kind.lower()
    except Exception:
        return 256
    if any(tag in kind for tag in ("v2", "v3", "v4", "v5")):
        return 128
    return 256


def _round_up(x: int, m: int) -> int:
    return ((x + m - 1) // m) * m


def lovasz_hinge_loss_pallas(pred: jax.Array, target: jax.Array,
                             *, r_max: int = 64, tile: int | None = None) -> jax.Array:
    """pred: (B, 1, H, W) float; target: (B, H, W) binary (any numeric dtype)."""
    assert pred.ndim == 4 and pred.shape[1] == 1
    assert target.ndim == 3
    assert pred.shape[-2:] == target.shape[-2:]
    assert r_max > 0 and r_max % 8 == 0

    B = pred.shape[0]
    pred_flat = pred.reshape(B, -1).astype(jnp.float32)        # (B, N)
    target_flat = target.reshape(B, -1).astype(jnp.float32)    # (B, N)
    N = pred_flat.shape[1]

    signs = 2.0 * target_flat - 1.0
    errors = 1.0 - pred_flat * signs

    # Descending sort of errors per row, carrying target with the permutation.
    # TODO(synk): lax.sort has no Mosaic lowering, so the sort stays in XLA glue.
    neg_sorted, target_sorted = jax.lax.sort((-errors, target_flat),
                                             dimension=1, num_keys=1)
    errors_sorted = -neg_sorted

    # ---- tiling: N -> (rows_padded, T), chunks of R rows per grid step ------
    T = _mxu_tile() if tile is None else tile
    rows = -(-N // T)
    if rows <= 1:
        R = 1
        rows_padded = 1
    else:
        r8 = _round_up(rows, 8)        # keep the sublane (second-minor) dim 8-aligned
        R = min(r_max, r8)
        rows_padded = _round_up(r8, R)
    n_pad = rows_padded * T - N
    if n_pad:
        # Padded tail: err = 0 (relu -> zero contribution), target = 0 (cumsum unchanged).
        errors_sorted = jnp.pad(errors_sorted, ((0, 0), (0, n_pad)))
        target_sorted = jnp.pad(target_sorted, ((0, 0), (0, n_pad)))

    err3 = errors_sorted.reshape(B, rows_padded, T)                    # f32
    tgt3 = target_sorted.reshape(B, rows_padded, T).astype(jnp.bfloat16)
    tsum = jnp.sum(target_flat, axis=1).reshape(B, 1, 1)               # f32

    idx = jnp.arange(T, dtype=jnp.int32)
    tri = (idx[:, None] <= idx[None, :]).astype(jnp.bfloat16)          # (T, T)
    ridx = jnp.arange(R, dtype=jnp.int32)
    low = (ridx[:, None] > ridx[None, :]).astype(jnp.float32)          # (R, R)

    num_chunks = rows_padded // R
    grid = (B, num_chunks)

    per_batch = pl.pallas_call(
        _lovasz_chunk_kernel,
        out_shape=jax.ShapeDtypeStruct((B, 1, 1), jnp.float32),
        grid_spec=pltpu.PrefetchScalarGridSpec(
            num_scalar_prefetch=0,
            grid=grid,
            in_specs=[
                pl.BlockSpec((1, R, T), lambda b, c: (b, c, 0)),   # errors chunk
                pl.BlockSpec((1, R, T), lambda b, c: (b, c, 0)),   # target chunk (bf16)
                pl.BlockSpec((1, 1, 1), lambda b, c: (b, 0, 0)),   # per-batch target sum
                pl.BlockSpec((T, T), lambda b, c: (0, 0)),         # triangular (resident)
                pl.BlockSpec((R, R), lambda b, c: (0, 0)),         # strict-lower (resident)
            ],
            out_specs=pl.BlockSpec((1, 1, 1), lambda b, c: (b, 0, 0)),
            scratch_shapes=[pltpu.VMEM((1, 1), jnp.float32)],      # cross-chunk cumsum carry
        ),
        compiler_params=pltpu.CompilerParams(
            dimension_semantics=("parallel", "arbitrary")),
    )(err3, tgt3, tsum, tri, low)

    return jnp.mean(per_batch)


def _lovasz_hinge_loss_ref(pred, target):
    # Pure-JAX reference mirroring the PyTorch implementation.
    B = pred.shape[0]
    pred_flat = pred.reshape(B, -1).astype(jnp.float32)
    target_flat = target.reshape(B, -1).astype(jnp.float32)
    N = pred_flat.shape[1]
    signs = 2.0 * target_flat - 1.0
    errors = 1.0 - pred_flat * signs
    neg_sorted, target_sorted = jax.lax.sort((-errors, target_flat),
                                             dimension=1, num_keys=1)
    errors_sorted = -neg_sorted
    t_sum = jnp.sum(target_sorted, axis=1, keepdims=True)
    intersection = t_sum - jnp.cumsum(target_sorted, axis=1)
    union = t_sum + jnp.cumsum(1.0 - target_sorted, axis=1)
    grad = 1.0 - intersection / union
    if N > 1:
        grad = jnp.concatenate([grad[:, :1], grad[:, 1:] - grad[:, :-1]], axis=1)
    return jnp.mean(jnp.sum(jax.nn.relu(errors_sorted) * grad, axis=1))


if __name__ == "__main__":
    key = jax.random.PRNGKey(0)
    k1, k2, k3, k4 = jax.random.split(key, 4)

    # Case 1: small shape from the module spec (single-chunk path).
    B, H, W = 2, 16, 16
    pred = jax.random.normal(k1, (B, 1, H, W), dtype=jnp.float32)
    target = jax.random.bernoulli(k2, 0.5, (B, H, W)).astype(jnp.int32)
    loss = jax.block_until_ready(lovasz_hinge_loss_pallas(pred, target))
    ref = jax.block_until_ready(_lovasz_hinge_loss_ref(pred, target))
    assert jnp.allclose(loss, ref, rtol=1e-4, atol=1e-5), (loss, ref)

    # Case 2: larger, non-tile-divisible N with a small chunk size so that the
    # multi-chunk carry path (sequential "arbitrary" axis + VMEM carry) runs.
    B2, H2, W2 = 2, 48, 48
    pred2 = jax.random.normal(k3, (B2, 1, H2, W2), dtype=jnp.float32)
    target2 = jax.random.bernoulli(k4, 0.5, (B2, H2, W2)).astype(jnp.int32)
    loss2 = jax.block_until_ready(lovasz_hinge_loss_pallas(pred2, target2, r_max=8))
    ref2 = jax.block_until_ready(_lovasz_hinge_loss_ref(pred2, target2))
    assert jnp.allclose(loss2, ref2, rtol=1e-4, atol=1e-5), (loss2, ref2)

    print("KERNEL_OK")
</pallas_src>

<mosaic_0001>
module attributes {stable_mosaic.version = 11 : i64} {
  func.func @_lovasz_chunk_kernel(%arg0: i32, %arg1: i32, %arg2: memref<1x1x256xf32, #tpu.memory_space<vmem>>, %arg3: memref<1x1x256xbf16, #tpu.memory_space<vmem>>, %arg4: memref<1x1x1xf32, #tpu.memory_space<vmem>>, %arg5: memref<256x256xbf16, #tpu.memory_space<vmem>>, %arg6: memref<1x1xf32, #tpu.memory_space<vmem>>, %arg7: memref<1x1x1xf32, #tpu.memory_space<vmem>>, %arg8: memref<1x1xf32, #tpu.memory_space<vmem>>) attributes {dimension_semantics = [#tpu.dimension_semantics<parallel>, #tpu.dimension_semantics<arbitrary>], iteration_bounds = array<i64: 2, 1>, scalar_prefetch = 0 : i64, scratch_operands = 1 : i64, tpu.core_type = #tpu.core_type<tc>, window_params = [{transform_indices = @transform_0, window_bounds = array<i64: 1, 1, 256>}, {transform_indices = @transform_1, window_bounds = array<i64: 1, 1, 256>}, {transform_indices = @transform_2, window_bounds = array<i64: 1, 1, 1>}, {pipeline_mode = #tpu.pipeline_mode<synchronous>, transform_indices = @transform_3, window_bounds = array<i64: 256, 256>}, {pipeline_mode = #tpu.pipeline_mode<synchronous>, transform_indices = @transform_4, window_bounds = array<i64: 1, 1>}, {transform_indices = @transform_5, window_bounds = array<i64: 1, 1, 1>}]} {
    %c0_i32 = arith.constant 0 : i32
    %0 = arith.cmpi eq, %arg1, %c0_i32 : i32
    %1 = arith.extui %0 : i1 to i32
    %c0_i32_0 = arith.constant 0 : i32
    %2 = arith.cmpi ne, %1, %c0_i32_0 : i32
    scf.if %2 {
      %cst_30 = arith.constant 0.000000e+00 : f32
      %67 = vector.broadcast %cst_30 : f32 to vector<1x1x1xf32>
      %c0_31 = arith.constant 0 : index
      %c0_32 = arith.constant 0 : index
      %c0_33 = arith.constant 0 : index
      %68 = vector.load %arg7[%c0_31, %c0_32, %c0_33] : memref<1x1x1xf32, #tpu.memory_space<vmem>>, vector<1x1x1xf32>
      tpu.vector_store %arg7[%c0_31, %c0_32, %c0_33], %67 {strides = array<i32>} : memref<1x1x1xf32, #tpu.memory_space<vmem>>, vector<1x1x1xf32>,
      %cst_34 = arith.constant 0.000000e+00 : f32
      %69 = vector.broadcast %cst_34 : f32 to vector<1x1xf32>
      %c0_35 = arith.constant 0 : index
      %c0_36 = arith.constant 0 : index
      %70 = vector.load %arg8[%c0_35, %c0_36] : memref<1x1xf32, #tpu.memory_space<vmem>>, vector<1x1xf32>
      tpu.vector_store %arg8[%c0_35, %c0_36], %69 {strides = array<i32>} : memref<1x1xf32, #tpu.memory_space<vmem>>, vector<1x1xf32>,
    } else {
    }
    %c0 = arith.constant 0 : index
    %c0_1 = arith.constant 0 : index
    %c0_2 = arith.constant 0 : index
    %3 = vector.load %arg2[%c0, %c0_1, %c0_2] : memref<1x1x256xf32, #tpu.memory_space<vmem>>, vector<1x1x256xf32>
    %4 = vector.shape_cast %3 : vector<1x1x256xf32> to vector<1x256xf32>
    %c0_3 = arith.constant 0 : index
    %c0_4 = arith.constant 0 : index
    %c0_5 = arith.constant 0 : index
    %5 = vector.load %arg3[%c0_3, %c0_4, %c0_5] : memref<1x1x256xbf16, #tpu.memory_space<vmem>>, vector<1x1x256xbf16>
    %6 = vector.shape_cast %5 : vector<1x1x256xbf16> to vector<1x256xbf16>
    %7 = arith.extf %6 : vector<1x256xbf16> to vector<1x256xf32>
    %c0_6 = arith.constant 0 : index
    %c0_7 = arith.constant 0 : index
    %c0_8 = arith.constant 0 : index
    %8 = vector.load %arg4[%c0_6, %c0_7, %c0_8] : memref<1x1x1xf32, #tpu.memory_space<vmem>>, vector<1x1x1xf32>
    %9 = vector.shape_cast %8 : vector<1x1x1xf32> to vector<1x1xf32>
    %c0_9 = arith.constant 0 : index
    %c0_10 = arith.constant 0 : index
    %10 = vector.load %arg5[%c0_9, %c0_10] : memref<256x256xbf16, #tpu.memory_space<vmem>>, vector<256x256xbf16>
    %cst = arith.constant dense<0.000000e+00> : vector<1x256xf32>
    %11 = tpu.matmul %6, %10, %cst {dimension_numbers = #tpu.dot_dimension_numbers<[1], [0], [0], [1], [0, 0, 1, 1], [], []>} : vector<1x256xbf16>, vector<256x256xbf16>, vector<1x256xf32> -> vector<1x256xf32>
    %c0_11 = arith.constant 0 : index
    %c0_12 = arith.constant 0 : index
    %12 = vector.load %arg8[%c0_11, %c0_12] : memref<1x1xf32, #tpu.memory_space<vmem>>, vector<1x1xf32>
    %13 = vector.broadcast %12 : vector<1x1xf32> to vector<1x256xf32>
    %14 = arith.addf %11, %13 : vector<1x256xf32>
    %15 = tpu.iota {dimensions = array<i32: 0>} : vector<1x256xi32>
    %16 = tpu.iota {dimensions = array<i32: 1>} : vector<1x256xi32>
    %c256_i32 = arith.constant 256 : i32
    %17 = arith.muli %arg1, %c256_i32 : i32
    %c256_i32_13 = arith.constant 256 : i32
    %18 = vector.broadcast %c256_i32_13 : i32 to vector<1x256xi32>
    %19 = arith.muli %15, %18 : vector<1x256xi32>
    %20 = vector.broadcast %17 : i32 to vector<1x256xi32>
    %21 = arith.addi %20, %19 : vector<1x256xi32>
    %22 = arith.addi %21, %16 : vector<1x256xi32>
    %23 = arith.sitofp %22 : vector<1x256xi32> to vector<1x256xf32>
    %cst_14 = arith.constant 1.000000e+00 : f32
    %24 = vector.broadcast %cst_14 : f32 to vector<1x256xf32>
    %25 = arith.addf %23, %24 : vector<1x256xf32>
    %26 = vector.broadcast %9 : vector<1x1xf32> to vector<1x256xf32>
    %27 = arith.addf %26, %25 : vector<1x256xf32>
    %28 = arith.subf %27, %14 : vector<1x256xf32>
    %29 = vector.broadcast %9 : vector<1x1xf32> to vector<1x256xf32>
    %30 = arith.subf %29, %14 : vector<1x256xf32>
    %31 = arith.divf %30, %28 : vector<1x256xf32>
    %cst_15 = arith.constant 1.000000e+00 : f32
    %32 = vector.broadcast %cst_15 : f32 to vector<1x256xf32>
    %33 = arith.subf %32, %31 : vector<1x256xf32>
    %34 = arith.subf %14, %7 : vector<1x256xf32>
    %35 = vector.broadcast %9 : vector<1x1xf32> to vector<1x256xf32>
    %36 = arith.addf %35, %23 : vector<1x256xf32>
    %37 = arith.subf %36, %34 : vector<1x256xf32>
    %c0_i32_16 = arith.constant 0 : i32
    %38 = vector.broadcast %c0_i32_16 : i32 to vector<1x256xi32>
    %39 = arith.cmpi eq, %22, %38 : vector<1x256xi32>
    %cst_17 = arith.constant 1.000000e+00 : f32
    %40 = vector.broadcast %cst_17 : f32 to vector<1x256xf32>
    %41 = arith.select %39, %40, %37 : vector<1x256xi1>, vector<1x256xf32>
    %42 = vector.broadcast %9 : vector<1x1xf32> to vector<1x256xf32>
    %43 = arith.subf %42, %34 : vector<1x256xf32>
    %44 = arith.divf %43, %41 : vector<1x256xf32>
    %cst_18 = arith.constant 1.000000e+00 : f32
    %45 = vector.broadcast %cst_18 : f32 to vector<1x256xf32>
    %46 = arith.subf %45, %44 : vector<1x256xf32>
    %c0_i32_19 = arith.constant 0 : i32
    %47 = vector.broadcast %c0_i32_19 : i32 to vector<1x256xi32>
    %48 = arith.cmpi eq, %22, %47 : vector<1x256xi32>
    %49 = arith.subf %33, %46 : vector<1x256xf32>
    %50 = arith.select %48, %33, %49 : vector<1x256xi1>, vector<1x256xf32>
    %cst_20 = arith.constant 0.000000e+00 : f32
    %51 = vector.broadcast %cst_20 : f32 to vector<1x256xf32>
    %52 = arith.maximumf %4, %51 : vector<1x256xf32>
    %53 = arith.mulf %52, %50 : vector<1x256xf32>
    %54 = vector.shape_cast %53 : vector<1x256xf32> to vector<1x1x256xf32>
    %cst_21 = arith.constant dense<0.000000e+00> : vector<1xf32>
    %55 = vector.multi_reduction <add>, %54, %cst_21 [1, 2] : vector<1x1x256xf32> to vector<1xf32>
    %56 = vector.shape_cast %55 : vector<1xf32> to vector<1x1x1xf32>
    %57 = vector.extract %56[0, 0, 0] : f32 from vector<1x1x1xf32>
    %58 = vector.broadcast %57 : f32 to vector<1x1xf32>
    %c0_22 = arith.constant 0 : index
    %c0_23 = arith.constant 0 : index
    %c0_24 = arith.constant 0 : index
    %59 = vector.load %arg7[%c0_22, %c0_23, %c0_24] : memref<1x1x1xf32, #tpu.memory_space<vmem>>, vector<1x1x1xf32>
    %60 = vector.shape_cast %59 : vector<1x1x1xf32> to vector<1x1xf32>
    %61 = arith.addf %60, %58 : vector<1x1xf32>
    %c0_25 = arith.constant 0 : index
    %c0_26 = arith.constant 0 : index
    %c0_27 = arith.constant 0 : index
    %62 = vector.load %arg7[%c0_25, %c0_26, %c0_27] : memref<1x1x1xf32, #tpu.memory_space<vmem>>, vector<1x1x1xf32>
    %63 = vector.shape_cast %62 : vector<1x1x1xf32> to vector<1x1xf32>
    %64 = vector.shape_cast %61 : vector<1x1xf32> to vector<1x1x1xf32>
    tpu.vector_store %arg7[%c0_25, %c0_26, %c0_27], %64 {strides = array<i32>} : memref<1x1x1xf32, #tpu.memory_space<vmem>>, vector<1x1x1xf32>,
    %65 = vector.extract_strided_slice %14 {offsets = [0, 255], sizes = [1, 1], strides = [1, 1]} : vector<1x256xf32> to vector<1x1xf32>
    %c0_28 = arith.constant 0 : index
    %c0_29 = arith.constant 0 : index
    %66 = vector.load %arg8[%c0_28, %c0_29] : memref<1x1xf32, #tpu.memory_space<vmem>>, vector<1x1xf32>
    tpu.vector_store %arg8[%c0_28, %c0_29], %65 {strides = array<i32>} : memref<1x1xf32, #tpu.memory_space<vmem>>, vector<1x1xf32>,
    return
  }
  func.func @transform_0(%arg0: i32, %arg1: i32) -> (i32, i32, i32) {
    %c0_i32 = arith.constant 0 : i32
    %c0_i32_0 = arith.constant 0 : i32
    return %arg0, %arg1, %c0_i32 : i32, i32, i32
  }
  func.func @transform_1(%arg0: i32, %arg1: i32) -> (i32, i32, i32) {
    %c0_i32 = arith.constant 0 : i32
    %c0_i32_0 = arith.constant 0 : i32
    return %arg0, %arg1, %c0_i32 : i32, i32, i32
  }
  func.func @transform_2(%arg0: i32, %arg1: i32) -> (i32, i32, i32) {
    %c0_i32 = arith.constant 0 : i32
    %c0_i32_0 = arith.constant 0 : i32
    %c0_i32_1 = arith.constant 0 : i32
    return %arg0, %c0_i32, %c0_i32_0 : i32, i32, i32
  }
  func.func @transform_3(%arg0: i32, %arg1: i32) -> (i32, i32) {
    %c0_i32 = arith.constant 0 : i32
    %c0_i32_0 = arith.constant 0 : i32
    %c0_i32_1 = arith.constant 0 : i32
    return %c0_i32, %c0_i32_0 : i32, i32
  }
  func.func @transform_4(%arg0: i32, %arg1: i32) -> (i32, i32) {
    %c0_i32 = arith.constant 0 : i32
    %c0_i32_0 = arith.constant 0 : i32
    %c0_i32_1 = arith.constant 0 : i32
    return %c0_i32, %c0_i32_0 : i32, i32
  }
  func.func @transform_5(%arg0: i32, %arg1: i32) -> (i32, i32, i32) {
    %c0_i32 = arith.constant 0 : i32
    %c0_i32_0 = arith.constant 0 : i32
    %c0_i32_1 = arith.constant 0 : i32
    return %arg0, %c0_i32, %c0_i32_0 : i32, i32, i32
  }
}

</mosaic_0001>

<llo_original>
// kernel: tpu_custom_call.1
$region0: #{tpu_custom_call.1}
  #allocation0 [shape = 'u32[]', space=smem, size = 0x4, offset = 0x4, fixed_abs, tag = 'smem constant byte address 0x4 - core index']
  #allocation1 [shape = 'u32[144,128]{1,0:T(1,128)}', space=vmem, size = 0x12000, scoped, tag = 'internal scratch']
  #allocation2 [shape = 'f32[1,1]{1,0:T(1,128)}', space=vmem, size = 0x200, scoped, tag = 'scratch operand']
  #allocation3 [shape = 'f32[1,1]{1,0:T(1,128)S(1)}', space=vmem, size = 0x200, scoped, tag = 'scoped memory for tpu_custom_call.1']
  %s0 = inlined_call_operand.vmem [shape: f32[2,1,256], index: 0, kind: input, shape index: {}]
  %s1 = inlined_call_operand.vmem [shape: bf16[2,1,256], index: 1, kind: input, shape index: {}]
  %s2 = inlined_call_operand.vmem [shape: f32[2,1,1], index: 2, kind: input, shape index: {}]
  %s3 = inlined_call_operand.hbm [shape: bf16[256,256], index: 3, kind: input, shape index: {}]
  %s4 = inlined_call_operand.<no memory space> [shape: f32[1,1], index: 4, kind: input, shape index: {}]
  %s5 = inlined_call_operand.vmem [shape: f32[2,1,1], index: 5, kind: output, shape index: {}]
  %s6 = sld [smem:[#allocation0]]
  $region61: #{tpu_custom_call.1} parent=0
    _
  %s8 = ssub.s32 1, %s6
  %s9 = scalar_select 0, %s8, %s6
  %v10 = vstv %s4
  %11 = vst [vmem:[#allocation3] sm:$0x1] %v10
  $region1: #{tpu_custom_call.1} parent=0
    #allocation4 [shape = 'u8[131072]{0}', space=vmem, size = 0x20000, scoped, tag = 'input window, operand 3, single buffered']
    #allocation5 [shape = 's32[2]{0}', space=sflag, size = 0x8, scoped, tag = 'scoped memory for tpu_custom_call.1']
    %12 = vsyncpa [#allocation5], 0
    loop: start=0, step=1, limit=4
    $region2: #{tpu_custom_call.1} parent=1 // loop_pre_header
      _
    $region3: #{tpu_custom_call.1} parent=1 // loop_header
      %s14 = sphi 0, %s18
      %p15 = scmp.ge.s32.totalorder %s14, 4
      %s21 = sphi 0, %s33
      %s22 = sphi 0, %s29
      %s23 = sphi 0, %s21
      %s24 = sphi 0, %s22
      %s25 = sphi 0, %s23
      %s26 = sphi 0, %s24
      %s38 = sphi 0, %s40
      %s41 = sphi 0, %s38
      %s42 = sphi 0, %s41
      %s58 = sphi 0, %s42
      %s66 = sphi 0, %s68
      %s69 = sphi 0, %s66
      %s70 = sphi 0, %s69
      %s86 = sphi 0, %s70
      %s92 = sphi 0, %s94
      %s95 = sphi 0, %s92
      %s96 = sphi 0, %s95
      %s112 = sphi 0, %s96
      %s116 = sphi 0, %s116
      %s118 = sphi 0, %s116
      %s119 = sphi 0, %s118
      %s133 = sphi 0, %s119
      %s137 = sphi 0, %s137
      %s139 = sphi 0, %s137
      %s140 = sphi 0, %s139
      %s154 = sphi 0, %s140
      %s160 = sphi 0, %s162
      %s163 = sphi 0, %s160
      %s164 = sphi 0, %s163
      %s180 = sphi 0, %s164
    $region4: #{tpu_custom_call.1} parent=1 // loop_header_branch
      %17 = sbr.rel (%p15) target = $region8
    $region5: #{tpu_custom_call.1} parent=1 // loop_body
      %s19 = ssub.s32 %s14, 1
      %s20 = ssub.s32 %s14, 2
      %s27 = sadd.s32 1, %s22
      %p28 = scmp.ge.s32.totalorder %s27, 1
      %s29 = scalar_select %p28, 0, %s27
      %s30 = sadd.s32 1, %s21
      %s31 = scalar_select %p28, %s30, %s21
      %p32 = scmp.ge.s32.totalorder %s31, 2
      %s33 = scalar_select %p32, 0, %s31
      %s34 = ssub.s32 %s21, %s33
      %s35 = ssub.s32 %s22, %s29
      %s36 = sor.u32 %s34, %s35
      %p37 = scmp.eq.s32.totalorder %s36, 0
      %s39 = sadd.s32 %s38, 1
      %s40 = scalar_select %p37, %s38, %s39
      %p43 = pneg %p37
      %p44 = scmp.eq.s32.totalorder %s14, 1
      %p45 = por %p43, %p44
      %p46 = scmp.ne.s32.totalorder %s38, %s41
      %p47 = scmp.eq.s32.totalorder %s14, 0
      %p48 = por %p46, %p47
      %p49 = scmp.ne.s32.totalorder %s38, %s41
      %p50 = scmp.eq.s32.totalorder %s19, 1
      %p51 = por %p49, %p50
      %p52 = scmp.ne.s32.totalorder %s41, %s42
      %p53 = scmp.eq.s32.totalorder %s19, 0
      %p54 = por %p52, %p53
      %p55 = scmp.ne.s32.totalorder %s41, %s42
      %p56 = scmp.eq.s32.totalorder %s20, 1
      %p57 = por %p55, %p56
      %p59 = scmp.ne.s32.totalorder %s42, %s58
      %p60 = scmp.eq.s32.totalorder %s20, 0
      %p61 = por %p59, %p60
      %s62 = ssub.s32 %s21, %s33
      %s63 = ssub.s32 %s22, %s29
      %s64 = sor.u32 %s62, %s63
      %p65 = scmp.eq.s32.totalorder %s64, 0
      %s67 = sadd.s32 %s66, 1
      %s68 = scalar_select %p65, %s66, %s67
      %p71 = pneg %p65
      %p72 = scmp.eq.s32.totalorder %s14, 1
      %p73 = por %p71, %p72
      %p74 = scmp.ne.s32.totalorder %s66, %s69
      %p75 = scmp.eq.s32.totalorder %s14, 0
      %p76 = por %p74, %p75
      %p77 = scmp.ne.s32.totalorder %s66, %s69
      %p78 = scmp.eq.s32.totalorder %s19, 1
      %p79 = por %p77, %p78
      %p80 = scmp.ne.s32.totalorder %s69, %s70
      %p81 = scmp.eq.s32.totalorder %s19, 0
      %p82 = por %p80, %p81
      %p83 = scmp.ne.s32.totalorder %s69, %s70
      %p84 = scmp.eq.s32.totalorder %s20, 1
      %p85 = por %p83, %p84
      %p87 = scmp.ne.s32.totalorder %s70, %s86
      %p88 = scmp.eq.s32.totalorder %s20, 0
      %p89 = por %p87, %p88
      %s90 = ssub.s32 %s21, %s33
      %p91 = scmp.eq.s32.totalorder %s90, 0
      %s93 = sadd.s32 %s92, 1
      %s94 = scalar_select %p91, %s92, %s93
      %p97 = pneg %p91
      %p98 = scmp.eq.s32.totalorder %s14, 1
      %p99 = por %p97, %p98
      %p100 = scmp.ne.s32.totalorder %s92, %s95
      %p101 = scmp.eq.s32.totalorder %s14, 0
      %p102 = por %p100, %p101
      %p103 = scmp.ne.s32.totalorder %s92, %s95
      %p104 = scmp.eq.s32.totalorder %s19, 1
      %p105 = por %p103, %p104
      %p106 = scmp.ne.s32.totalorder %s95, %s96
      %p107 = scmp.eq.s32.totalorder %s19, 0
      %p108 = por %p106, %p107
      %p109 = scmp.ne.s32.totalorder %s95, %s96
      %p110 = scmp.eq.s32.totalorder %s20, 1
      %p111 = por %p109, %p110
      %p113 = scmp.ne.s32.totalorder %s96, %s112
      %p114 = scmp.eq.s32.totalorder %s20, 0
      %p115 = por %p113, %p114
      %s117 = sadd.s32 %s116, 1
      %p120 = scmp.eq.s32.totalorder %s14, 1
      %p121 = scmp.ne.s32.totalorder %s116, %s118
      %p122 = scmp.eq.s32.totalorder %s14, 0
      %p123 = por %p121, %p122
      %p124 = scmp.ne.s32.totalorder %s116, %s118
      %p125 = scmp.eq.s32.totalorder %s19, 1
      %p126 = por %p124, %p125
      %p127 = scmp.ne.s32.totalorder %s118, %s119
      %p128 = scmp.eq.s32.totalorder %s19, 0
      %p129 = por %p127, %p128
      %p130 = scmp.ne.s32.totalorder %s118, %s119
      %p131 = scmp.eq.s32.totalorder %s20, 1
      %p132 = por %p130, %p131
      %p134 = scmp.ne.s32.totalorder %s119, %s133
      %p135 = scmp.eq.s32.totalorder %s20, 0
      %p136 = por %p134, %p135
      %s138 = sadd.s32 %s137, 1
      %p141 = scmp.eq.s32.totalorder %s14, 1
      %p142 = scmp.ne.s32.totalorder %s137, %s139
      %p143 = scmp.eq.s32.totalorder %s14, 0
      %p144 = por %p142, %p143
      %p145 = scmp.ne.s32.totalorder %s137, %s139
      %p146 = scmp.eq.s32.totalorder %s19, 1
      %p147 = por %p145, %p146
      %p148 = scmp.ne.s32.totalorder %s139, %s140
      %p149 = scmp.eq.s32.totalorder %s19, 0
      %p150 = por %p148, %p149
      %p151 = scmp.ne.s32.totalorder %s139, %s140
      %p152 = scmp.eq.s32.totalorder %s20, 1
      %p153 = por %p151, %p152
      %p155 = scmp.ne.s32.totalorder %s140, %s154
      %p156 = scmp.eq.s32.totalorder %s20, 0
      %p157 = por %p155, %p156
      %s158 = ssub.s32 %s21, %s33
      %p159 = scmp.eq.s32.totalorder %s158, 0
      %s161 = sadd.s32 %s160, 1
      %s162 = scalar_select %p159, %s160, %s161
      %p165 = pneg %p159
      %p166 = scmp.eq.s32.totalorder %s14, 1
      %p167 = por %p165, %p166
      %p168 = scmp.ne.s32.totalorder %s160, %s163
      %p169 = scmp.eq.s32.totalorder %s14, 0
      %p170 = por %p168, %p169
      %p171 = scmp.ne.s32.totalorder %s160, %s163
      %p172 = scmp.eq.s32.totalorder %s19, 1
      %p173 = por %p171, %p172
      %p174 = scmp.ne.s32.totalorder %s163, %s164
      %p175 = scmp.eq.s32.totalorder %s19, 0
      %p176 = por %p174, %p175
      %p177 = scmp.ne.s32.totalorder %s163, %s164
      %p178 = scmp.eq.s32.totalorder %s20, 1
      %p179 = por %p177, %p178
      %p181 = scmp.ne.s32.totalorder %s164, %s180
      %p182 = scmp.eq.s32.totalorder %s20, 0
      %p183 = por %p181, %p182
      %p184 = scmp.le.s32.totalorder 1, %s14
      %p185 = scmp.lt.s32.totalorder %s14, 3
      %p186 = pnand %p184, %p185
      %p187 = pneg %p186
      // Predicated region
      $region9: #{tpu_custom_call.1} parent=5 // pred_check
        _
      $region10: #{tpu_custom_call.1} parent=5 // pred_check_branch
        %189 = sbr.rel (%p186) target = $region12
      $region11: #{tpu_custom_call.1} parent=5 // pred_region
        %s190 = ssub.s32 %s14, 1
        // Predicated region
        $region13: #{tpu_custom_call.1} parent=11 // pred_check
          %p191 = pneg %p129
        $region14: #{tpu_custom_call.1} parent=11 // pred_check_branch
          %193 = sbr.rel (%p191) target = $region16
        $region15: #{tpu_custom_call.1} parent=11 // pred_region
          %s195 = ssub.s32 4096, 4096
          %196 = vsyncadd [#allocation5], %s195
          %s197 = sshll.u32 [#allocation4], 4
          %s198 = int_to_ptr.vmem [resolvable:$true] %s197
          %203 = dma.hbm_to_vmem [thread:$0]  %s3, 4096, %s198, [#allocation5], 128, 128, 8
        $region16: #{tpu_custom_call.1} parent=11 // pred_fallthru
          _
        // Predicated region
        $region17: #{tpu_custom_call.1} parent=11 // pred_check
          %p204 = pneg %p150
        $region18: #{tpu_custom_call.1} parent=11 // pred_check_branch
          %206 = sbr.rel (%p204) target = $region20
        $region19: #{tpu_custom_call.1} parent=11 // pred_region
          _
        $region20: #{tpu_custom_call.1} parent=11 // pred_fallthru
          _
      $region12: #{tpu_custom_call.1} parent=5 // pred_fallthru
        _
      %p207 = scmp.lt.s32.totalorder %s14, 2
      // Predicated region
      $region21: #{tpu_custom_call.1} parent=5 // pred_check
        %p208 = pneg %p207
      $region22: #{tpu_custom_call.1} parent=5 // pred_check_branch
        %210 = sbr.rel (%p208) target = $region24
      $region23: #{tpu_custom_call.1} parent=5 // pred_region
        // Predicated region
        $region25: #{tpu_custom_call.1} parent=23 // pred_check
          %p211 = pneg %p48
        $region26: #{tpu_custom_call.1} parent=23 // pred_check_branch
          %213 = sbr.rel (%p211) target = $region28
        $region27: #{tpu_custom_call.1} parent=23 // pred_region
          %p214 = scmp.lt.s32.totalorder %s21, 1
          %s215 = scalar_select %p214, %s21, 1
          %p216 = scmp.lt.s32.totalorder %s22, 0
          %s217 = scalar_select %p216, %s22, 0
          %s218 = smul.addr %s217, 2
          %s219 = smul.addr %s215, 2
          %s220 = sadd.s32 %s218, %s219
          %s221 = scalar_lea.vmem %s0, %s220
        $region28: #{tpu_custom_call.1} parent=23 // pred_fallthru
          _
        // Predicated region
        $region29: #{tpu_custom_call.1} parent=23 // pred_check
          %p222 = pneg %p76
        $region30: #{tpu_custom_call.1} parent=23 // pred_check_branch
          %224 = sbr.rel (%p222) target = $region32
        $region31: #{tpu_custom_call.1} parent=23 // pred_region
          %p225 = scmp.lt.s32.totalorder %s21, 1
          %s226 = scalar_select %p225, %s21, 1
          %p227 = scmp.lt.s32.totalorder %s22, 0
          %s228 = scalar_select %p227, %s22, 0
          %s229 = smul.addr %s228, 2
          %s230 = smul.addr %s226, 2
          %s231 = sadd.s32 %s229, %s230
          %s232 = scalar_lea.vmem %s1, %s231
        $region32: #{tpu_custom_call.1} parent=23 // pred_fallthru
          _
        // Predicated region
        $region33: #{tpu_custom_call.1} parent=23 // pred_check
          %p233 = pneg %p102
        $region34: #{tpu_custom_call.1} parent=23 // pred_check_branch
          %235 = sbr.rel (%p233) target = $region36
        $region35: #{tpu_custom_call.1} parent=23 // pred_region
          %p236 = scmp.lt.s32.totalorder %s21, 1
          %s237 = scalar_select %p236, %s21, 1
          %s238 = scalar_lea.vmem %s2, %s237
        $region36: #{tpu_custom_call.1} parent=23 // pred_fallthru
          _
      $region24: #{tpu_custom_call.1} parent=5 // pred_fallthru
        _
      %p239 = scmp.le.s32.totalorder 1, %s14
      %p240 = scmp.lt.s32.totalorder %s14, 3
      %p241 = pnand %p239, %p240
      %p242 = pneg %p241
      // Predicated region
      $region37: #{tpu_custom_call.1} parent=5 // pred_check
        _
      $region38: #{tpu_custom_call.1} parent=5 // pred_check_branch
        %244 = sbr.rel (%p241) target = $region40
      $region39: #{tpu_custom_call.1} parent=5 // pred_region
        %s245 = ssub.s32 %s14, 1
        // Predicated region
        $region41: #{tpu_custom_call.1} parent=39 // pred_check
          %p246 = pneg %p129
        $region42: #{tpu_custom_call.1} parent=39 // pred_check_branch
          %248 = sbr.rel (%p246) target = $region44
        $region43: #{tpu_custom_call.1} parent=39 // pred_region
          %249 = dma.done [#allocation5], 4096
        $region44: #{tpu_custom_call.1} parent=39 // pred_fallthru
          _
        %p250 = scmp.lt.s32.totalorder %s23, 1
        %s251 = scalar_select %p250, %s23, 1
        %p252 = scmp.lt.s32.totalorder %s24, 0
        %s253 = scalar_select %p252, %s24, 0
        %s254 = smul.addr %s253, 2
        %s255 = smul.addr %s251, 2
        %s256 = sadd.s32 %s254, %s255
        %s257 = scalar_lea.vmem %s0, %s256
        %p258 = pneg %p54
        %p259 = pneg %p51
        %p260 = scmp.lt.s32.totalorder %s23, 1
        %s261 = scalar_select %p260, %s23, 1
        %p262 = scmp.lt.s32.totalorder %s24, 0
        %s263 = scalar_select %p262, %s24, 0
        %s264 = smul.addr %s263, 2
        %s265 = smul.addr %s261, 2
        %s266 = sadd.s32 %s264, %s265
        %s267 = scalar_lea.vmem %s1, %s266
        %p268 = pneg %p82
        %p269 = pneg %p79
        %p270 = scmp.lt.s32.totalorder %s23, 1
        %s271 = scalar_select %p270, %s23, 1
        %s272 = scalar_lea.vmem %s2, %s271
        %p273 = pneg %p108
        %p274 = pneg %p105
        %p275 = pneg %p129
        %p276 = pneg %p126
        %p277 = pneg %p150
        %p278 = pneg %p147
        %p279 = pneg %p176
        %p280 = pneg %p173
        %p281 = scmp.lt.s32.totalorder %s23, 1
        %s282 = scalar_select %p281, %s23, 1
        %s283 = scalar_lea.vmem %s5, %s282
        %p284 = scmp.lt.s32.totalorder %s23, 1
        %s285 = scalar_select %p284, %s23, 1
        %p286 = scmp.lt.s32.totalorder %s24, 0
        %s287 = scalar_select %p286, %s24, 0
        %s288 = smul.addr %s287, 2
        %s289 = smul.addr %s285, 2
        %s290 = sadd.s32 %s288, %s289
        %s291 = scalar_lea.vmem %s0, %s290
        %p292 = scmp.lt.s32.totalorder %s23, 1
        %s293 = scalar_select %p292, %s23, 1
        %p294 = scmp.lt.s32.totalorder %s24, 0
        %s295 = scalar_select %p294, %s24, 0
        %s296 = smul.addr %s295, 2
        %s297 = smul.addr %s293, 2
        %s298 = sadd.s32 %s296, %s297
        %s299 = scalar_lea.vmem %s1, %s298
        %p300 = scmp.lt.s32.totalorder %s23, 1
        %s301 = scalar_select %p300, %s23, 1
        %s302 = scalar_lea.vmem %s2, %s301
        %p303 = scmp.lt.s32.totalorder %s23, 1
        %s304 = scalar_select %p303, %s23, 1
        %s305 = scalar_lea.vmem %s5, %s304
        %p306 = scmp.eq.s32.totalorder %s24, 0
        // Predicated region
        $region45: #{tpu_custom_call.1} parent=39 // pred_check
          %p307 = pneg %p306
        $region46: #{tpu_custom_call.1} parent=39 // pred_check_branch
          %309 = sbr.rel (%p307) target = $region48
        $region47: #{tpu_custom_call.1} parent=39 // pred_region
          %vm310 = vcmask 0
          %311 = vst.msk [vmem:[%s305] sm:$0x1] %vm310, 0.0
          %312 = vst.msk [vmem:[#allocation2] sm:$0x1] %vm310, 0.0
        $region48: #{tpu_custom_call.1} parent=39 // pred_fallthru
          _
        %v313 = vld [vmem:[%s291] sm:$0x3]
        %v314 = vld [vmem:[%s299] sm:$0x3]
        %v315 = vunpack.c.l.bf16 %v314
        %v316 = vld [vmem:[%s302] sm:$0x1]
        %v317 = vld [vmem:[#allocation4] sm:$0xff]
        %v318 = vld [vmem:[#allocation4 + $0x8] sm:$0xff]
        %v319 = vld [vmem:[#allocation4 + $0x10] sm:$0xff]
        %v320 = vld [vmem:[#allocation4 + $0x18] sm:$0xff]
        %v321 = vld [vmem:[#allocation4 + $0x20] sm:$0xff]
        %v322 = vld [vmem:[#allocation4 + $0x28] sm:$0xff]
        %v323 = vld [vmem:[#allocation4 + $0x30] sm:$0xff]
        %v324 = vld [vmem:[#allocation4 + $0x38] sm:$0xff]
        %v325 = vld [vmem:[#allocation4 + $0x40] sm:$0xff]
        %v326 = vld [vmem:[#allocation4 + $0x48] sm:$0xff]
        %v327 = vld [vmem:[#allocation4 + $0x50] sm:$0xff]
        %v328 = vld [vmem:[#allocation4 + $0x58] sm:$0xff]
        %v329 = vld [vmem:[#allocation4 + $0x60] sm:$0xff]
        %v330 = vld [vmem:[#allocation4 + $0x68] sm:$0xff]
        %v331 = vld [vmem:[#allocation4 + $0x70] sm:$0xff]
        %v332 = vld [vmem:[#allocation4 + $0x78] sm:$0xff]
        %v333 = vld [vmem:[#allocation4 + $0x80] sm:$0xff]
        %v334 = vld [vmem:[#allocation4 + $0x88] sm:$0xff]
        %v335 = vld [vmem:[#allocation4 + $0x90] sm:$0xff]
        %v336 = vld [vmem:[#allocation4 + $0x98] sm:$0xff]
        %v337 = vld [vmem:[#allocation4 + $0xa0] sm:$0xff]
        %v338 = vld [vmem:[#allocation4 + $0xa8] sm:$0xff]
        %v339 = vld [vmem:[#allocation4 + $0xb0] sm:$0xff]
        %v340 = vld [vmem:[#allocation4 + $0xb8] sm:$0xff]
        %v341 = vld [vmem:[#allocation4 + $0xc0] sm:$0xff]
        %v342 = vld [vmem:[#allocation4 + $0xc8] sm:$0xff]
        %v343 = vld [vmem:[#allocation4 + $0xd0] sm:$0xff]
        %v344 = vld [vmem:[#allocation4 + $0xd8] sm:$0xff]
        %v345 = vld [vmem:[#allocation4 + $0xe0] sm:$0xff]
        %v346 = vld [vmem:[#allocation4 + $0xe8] sm:$0xff]
        %v347 = vld [vmem:[#allocation4 + $0xf0] sm:$0xff]
        %v348 = vld [vmem:[#allocation4 + $0xf8] sm:$0xff]
        %v349 = vld [vmem:[#allocation2] sm:$0x1]
        %351 = vset.pattern.permute.xlu0 0
        %352 = vperm.xlu0 %351, %v349
        %v353 = vpop.permute.xlu0 %352
        %v355 = vlaneseq
        %v356 = vshrl.u32 %v355, 7
        %v357 = vsub.s32 0, %v356
        %v358 = vrot.slane %v353, %v357
        %v361 = vunpack.c.l.s4 1966171168
        %v362 = vunpack.c.0.s8 %v361
        %v363 = vlaneseq
        %v364 = vshrl.u32 %v363, 7
        %v365 = vsub.s32 %v362, %v364
        %v366 = vrot.slane %v314, %v365
        %v367 = vcombine.high %v366, %v366
        %v369 = vunpack.c.l.s4 1966171168
        %v370 = vunpack.c.0.s8 %v369
        %v371 = vlaneseq
        %v372 = vshrl.u32 %v371, 7
        %v373 = vsub.s32 %v370, %v372
        %v374 = vrot.slane %v366, %v373
        %v376 = vunpack.c.l.s4 1966171168
        %v377 = vunpack.c.0.s8 %v376
        %v378 = vlaneseq
        %v379 = vshrl.u32 %v378, 7
        %v380 = vsub.s32 %v377, %v379
        %v381 = vrot.slane %v367, %v380
        %v416 = vunpack.c.l.b16 %v317
        %v417 = vunpack.c.h.b16 %v317
        %v418 = vunpack.c.l.b16 %v318
        %v419 = vunpack.c.h.b16 %v318
        %v420 = vunpack.c.l.b16 %v319
        %v421 = vunpack.c.h.b16 %v319
        %v422 = vunpack.c.l.b16 %v320
        %v423 = vunpack.c.h.b16 %v320
        %v424 = vunpack.c.l.b16 %v321
        %v425 = vunpack.c.h.b16 %v321
        %v426 = vunpack.c.l.b16 %v322
        %v427 = vunpack.c.h.b16 %v322
        %v428 = vunpack.c.l.b16 %v323
        %v429 = vunpack.c.h.b16 %v323
        %v430 = vunpack.c.l.b16 %v324
        %v431 = vunpack.c.h.b16 %v324
        %v432 = vunpack.c.l.b16 %v325
        %v433 = vunpack.c.h.b16 %v325
        %v434 = vunpack.c.l.b16 %v326
        %v435 = vunpack.c.h.b16 %v326
        %v436 = vunpack.c.l.b16 %v327
        %v437 = vunpack.c.h.b16 %v327
        %v438 = vunpack.c.l.b16 %v328
        %v439 = vunpack.c.h.b16 %v328
        %v440 = vunpack.c.l.b16 %v329
        %v441 = vunpack.c.h.b16 %v329
        %v442 = vunpack.c.l.b16 %v330
        %v443 = vunpack.c.h.b16 %v330
        %v444 = vunpack.c.l.b16 %v331
        %v445 = vunpack.c.h.b16 %v331
        %v446 = vunpack.c.l.b16 %v332
        %v447 = vunpack.c.h.b16 %v332
        %v448 = vunpack.c.l.b16 %v333
        %v449 = vunpack.c.h.b16 %v333
        %v450 = vunpack.c.l.b16 %v334
        %v451 = vunpack.c.h.b16 %v334
        %v452 = vunpack.c.l.b16 %v335
        %v453 = vunpack.c.h.b16 %v335
        %v454 = vunpack.c.l.b16 %v336
        %v455 = vunpack.c.h.b16 %v336
        %v456 = vunpack.c.l.b16 %v337
        %v457 = vunpack.c.h.b16 %v337
        %v458 = vunpack.c.l.b16 %v338
        %v459 = vunpack.c.h.b16 %v338
        %v460 = vunpack.c.l.b16 %v339
        %v461 = vunpack.c.h.b16 %v339
        %v462 = vunpack.c.l.b16 %v340
        %v463 = vunpack.c.h.b16 %v340
        %v464 = vunpack.c.l.b16 %v341
        %v465 = vunpack.c.h.b16 %v341
        %v466 = vunpack.c.l.b16 %v342
        %v467 = vunpack.c.h.b16 %v342
        %v468 = vunpack.c.l.b16 %v343
        %v469 = vunpack.c.h.b16 %v343
        %v470 = vunpack.c.l.b16 %v344
        %v471 = vunpack.c.h.b16 %v344
        %v472 = vunpack.c.l.b16 %v345
        %v473 = vunpack.c.h.b16 %v345
        %v474 = vunpack.c.l.b16 %v346
        %v475 = vunpack.c.h.b16 %v346
        %v476 = vunpack.c.l.b16 %v347
        %v477 = vunpack.c.h.b16 %v347
        %v478 = vunpack.c.l.b16 %v348
        %v479 = vunpack.c.h.b16 %v348
        %v480 = vpack.c.b16 %v418, %v416
        %v481 = vpack.c.b16 %v419, %v417
        %v482 = vpack.c.b16 %v422, %v420
        %v483 = vpack.c.b16 %v423, %v421
        %v484 = vpack.c.b16 %v426, %v424
        %v485 = vpack.c.b16 %v427, %v425
        %v486 = vpack.c.b16 %v430, %v428
        %v487 = vpack.c.b16 %v431, %v429
        %v488 = vpack.c.b16 %v434, %v432
        %v489 = vpack.c.b16 %v435, %v433
        %v490 = vpack.c.b16 %v438, %v436
        %v491 = vpack.c.b16 %v439, %v437
        %v492 = vpack.c.b16 %v442, %v440
        %v493 = vpack.c.b16 %v443, %v441
        %v494 = vpack.c.b16 %v446, %v444
        %v495 = vpack.c.b16 %v447, %v445
        %v496 = vpack.c.b16 %v450, %v448
        %v497 = vpack.c.b16 %v451, %v449
        %v498 = vpack.c.b16 %v454, %v452
        %v499 = vpack.c.b16 %v455, %v453
        %v500 = vpack.c.b16 %v458, %v456
        %v501 = vpack.c.b16 %v459, %v457
        %v502 = vpack.c.b16 %v462, %v460
        %v503 = vpack.c.b16 %v463, %v461
        %v504 = vpack.c.b16 %v466, %v464
        %v505 = vpack.c.b16 %v467, %v465
        %v506 = vpack.c.b16 %v470, %v468
        %v507 = vpack.c.b16 %v471, %v469
        %v508 = vpack.c.b16 %v474, %v472
        %v509 = vpack.c.b16 %v475, %v473
        %v510 = vpack.c.b16 %v478, %v476
        %v511 = vpack.c.b16 %v479, %v477
        %544 = vmatprep.subr.bf16.mxu0 %v481
        %545 = vmatpush1.bf16.msra.mxu0 %v480
        %546 = vmatprep.subr.bf16.mxu0 %v483
        %547 = vmatpush1.bf16.msra.mxu0 %v482
        %548 = vmatprep.subr.bf16.mxu0 %v485
        %549 = vmatpush1.bf16.msra.mxu0 %v484
        %550 = vmatprep.subr.bf16.mxu0 %v487
        %551 = vmatpush1.bf16.msra.mxu0 %v486
        %552 = vmatprep.subr.bf16.mxu0 %v489
        %553 = vmatpush1.bf16.msra.mxu0 %v488
        %554 = vmatprep.subr.bf16.mxu0 %v491
        %555 = vmatpush1.bf16.msra.mxu0 %v490
        %556 = vmatprep.subr.bf16.mxu0 %v493
        %557 = vmatpush1.bf16.msra.mxu0 %v492
        %558 = vmatprep.subr.bf16.mxu0 %v495
        %559 = vmatpush1.bf16.msra.mxu0 %v494
        %560 = vmatprep.subr.bf16.mxu0 %v497
        %561 = vmatpush1.bf16.msra.mxu0 %v496
        %562 = vmatprep.subr.bf16.mxu0 %v499
        %563 = vmatpush1.bf16.msra.mxu0 %v498
        %564 = vmatprep.subr.bf16.mxu0 %v501
        %565 = vmatpush1.bf16.msra.mxu0 %v500
        %566 = vmatprep.subr.bf16.mxu0 %v503
        %567 = vmatpush1.bf16.msra.mxu0 %v502
        %568 = vmatprep.subr.bf16.mxu0 %v505
        %569 = vmatpush1.bf16.msra.mxu0 %v504
        %570 = vmatprep.subr.bf16.mxu0 %v507
        %571 = vmatpush1.bf16.msra.mxu0 %v506
        %572 = vmatprep.subr.bf16.mxu0 %v509
        %573 = vmatpush1.bf16.msra.mxu0 %v508
        %574 = vmatprep.subr.bf16.mxu0 %v511
        %575 = vmatpush1.bf16.msra.mxu0 %v510
        %576 = vmatprep.mubr.bf16.mxu0 %v381
        %577 = vmatmul.mubr.bf16.gmra.mrb[0].mxu0 %v374
        %v578 = vpop.f32.mrb[0].mxu0
        %v579 = vadd.f32 %v358, %v578
        %v580 = vpop.f32.mrb[0].mxu0
        %v581 = vadd.f32 %v358, %v580
        %v582 = vpop.f32.mrb[0].mxu0
        %v583 = vpop.f32.mrb[0].mxu0
        %584 = vdwg.mxu0
        %v585 = vlaneseq
        %v586 = vshrl.u32 %v585, 7
        %v587 = vlaneseq
        %v588 = vand.u32 %v587, 127
        %v589 = vadd.s32 %v588, 128
        %s590 = smul.u32 %s24, 256
        %v591 = vmul.u32 %v586, 256
        %v592 = vstv %s590
        %v593 = vadd.s32 %v592, %v591
        %v594 = vadd.s32 %v593, %v588
        %v595 = vadd.s32 %v593, %v589
        %v596 = vcvt.s32.f32 %v594
        %v597 = vcvt.s32.f32 %v595
        %v598 = vadd.f32 %v596, 1.0
        %v599 = vadd.f32 %v597, 1.0
        %601 = vset.pattern.permute.xlu0 0
        %602 = vperm.xlu0 %601, %v316
        %v603 = vpop.permute.xlu0 %602
        %v605 = vlaneseq
        %v606 = vshrl.u32 %v605, 7
        %v607 = vsub.s32 0, %v606
        %v608 = vrot.slane %v603, %v607
        %v609 = vadd.f32 %v608, %v598
        %v610 = vadd.f32 %v608, %v599
        %v611 = vsub.f32 %v609, %v579
        %v612 = vsub.f32 %v610, %v581
        %v613 = vsub.f32 %v608, %v579
        %v614 = vsub.f32 %v608, %v581
        %v615 = vrcp.pop %v611
        %v616 = vmul.f32 %v613, %v615
        %v617 = vrcp.pop %v612
        %v618 = vmul.f32 %v614, %v617
        %v619 = vsub.f32 1.0, %v616
        %v620 = vsub.f32 1.0, %v618
        %v622 = vlaneseq
        %v623 = vshrl.u32 %v622, 7
        %v624 = vsub.s32 0, %v623
        %v625 = vrot.slane %v315, %v624
        %v626 = vlaneseq
        %v627 = vshrl.u32 %v626, 7
        %v628 = vsub.s32 2, %v627
        %v629 = vrot.slane %v315, %v628
        %v632 = vsub.f32 %v579, %v625
        %v633 = vsub.f32 %v581, %v629
        %v634 = vadd.f32 %v608, %v596
        %v635 = vadd.f32 %v608, %v597
        %v636 = vsub.f32 %v634, %v632
        %v637 = vsub.f32 %v635, %v633
        %vm638 = vcmp.eq.s32.totalorder %v594, 0
        %vm639 = vcmp.eq.s32.totalorder %v595, 0
        %v640 = vsel %vm638, 1.0, %v636
        %v641 = vsel %vm639, 1.0, %v637
        %v642 = vsub.f32 %v608, %v632
        %v643 = vsub.f32 %v608, %v633
        %v644 = vrcp.pop %v640
        %v645 = vmul.f32 %v642, %v644
        %v646 = vrcp.pop %v641
        %v647 = vmul.f32 %v643, %v646
        %v648 = vsub.f32 1.0, %v645
        %v649 = vsub.f32 1.0, %v647
        %v650 = vsub.f32 %v619, %v648
        %v651 = vsub.f32 %v620, %v649
        %v652 = vsel %vm638, %v619, %v650
        %v653 = vsel %vm639, %v620, %v651
        %v654 = vmax.f32 %v313, 0.0
        %v657 = vcombine.low %v652, %v653
        %v659 = vunpack.c.l.s4 1966171168
        %v660 = vunpack.c.0.s8 %v659
        %v661 = vlaneseq
        %v662 = vshrl.u32 %v661, 7
        %v663 = vsub.s32 %v660, %v662
        %v664 = vrot.slane %v657, %v663
        %v666 = vunpack.c.l.s4 1966171168
        %v667 = vunpack.c.0.s8 %v666
        %v668 = vlaneseq
        %v669 = vshrl.u32 %v668, 7
        %v670 = vsub.s32 %v667, %v669
        %v671 = vrot.slane %v664, %v670
        %v673 = vmul.f32 %v654, %v671
        %v675 = vlaneseq
        %v676 = vshrl.u32 %v675, 7
        %v677 = vsub.s32 0, %v676
        %v678 = vrot.slane %v673, %v677
        %v679 = vlaneseq
        %v680 = vshrl.u32 %v679, 7
        %v681 = vsub.s32 1, %v680
        %v682 = vrot.slane %v673, %v681
        %vm685 = vcmask 1040384
        %v686 = vsel %vm685, %v678, 0.0
        %v687 = vsel %vm685, %v682, 0.0
        %v688 = vadd.f32 %v686, %v687
        %689 = vadd.xlane.f32.xlu0 %v688
        %v690 = vpop.xlane.xlu0 %689
        %v691 = vrot.slane %v690, 4
        %v692 = vadd.f32 %v690, %v691
        %v693 = vrot.slane %v692, 2
        %v694 = vadd.f32 %v692, %v693
        %v695 = vrot.slane %v694, 1
        %v696 = vadd.f32 %v694, %v695
        %s697 = vtos %v696
        %v698 = vstv %s697
        %v699 = vld [vmem:[%s305] sm:$0x1]
        %v700 = vadd.f32 %v699, %v698
        %vm701 = vcmask 0
        %702 = vst.msk [vmem:[%s305] sm:$0x1] %vm701, %v700
        %704 = vrot.lane.b32.xlu0 %v581, 1
        %v705 = vpop.permute.xlu0 %704
        %707 = vst.msk [vmem:[#allocation2] sm:$0x1] %vm701, %v705
        %p708 = scmp.lt.s32.totalorder %s23, 1
        %s709 = scalar_select %p708, %s23, 1
        %s710 = scalar_lea.vmem %s5, %s709
        // Predicated region
        $region49: #{tpu_custom_call.1} parent=39 // pred_check
          %p711 = pneg %p173
        $region50: #{tpu_custom_call.1} parent=39 // pred_check_branch
          %713 = sbr.rel (%p711) target = $region52
        $region51: #{tpu_custom_call.1} parent=39 // pred_region
          _
        $region52: #{tpu_custom_call.1} parent=39 // pred_fallthru
          _
      $region40: #{tpu_custom_call.1} parent=5 // pred_fallthru
        _
      %p714 = scmp.le.s32.totalorder 2, %s14
      // Predicated region
      $region53: #{tpu_custom_call.1} parent=5 // pred_check
        %p715 = pneg %p714
      $region54: #{tpu_custom_call.1} parent=5 // pred_check_branch
        %717 = sbr.rel (%p715) target = $region56
      $region55: #{tpu_custom_call.1} parent=5 // pred_region
        %s718 = ssub.s32 %s14, 2
        // Predicated region
        $region57: #{tpu_custom_call.1} parent=55 // pred_check
          %p719 = pneg %p179
        $region58: #{tpu_custom_call.1} parent=55 // pred_check_branch
          %721 = sbr.rel (%p719) target = $region60
        $region59: #{tpu_custom_call.1} parent=55 // pred_region
          %p722 = scmp.lt.s32.totalorder %s25, 1
          %s723 = scalar_select %p722, %s25, 1
          %s724 = scalar_lea.vmem %s5, %s723
        $region60: #{tpu_custom_call.1} parent=55 // pred_fallthru
          _
      $region56: #{tpu_custom_call.1} parent=5 // pred_fallthru
        _
    $region6: #{tpu_custom_call.1} parent=1 // loop_footer
      %s18 = sadd.s32 1, %s14
    $region7: #{tpu_custom_call.1} parent=1 // loop_footer_branch
      %13 = sbr.rel target = $region3
    $region8: #{tpu_custom_call.1} parent=1 // loop_exit
      _
    %725 = vsyncpa [#allocation5], 1
    %s726 = scalar_lea.sflag [#allocation5], 1
    %727 = vsyncpa %s726, 1

</llo_original>
